<compile_context>
chip_gen: v7x
topology: tpu7x:2x2x1
jax: 0.10.0
libtpu: 0.0.40
codegen_flags: <defaults>
</compile_context>

<pallas_src>
import functools

import jax
import jax.numpy as jnp
from jax.experimental import pallas as pl
from jax.experimental.pallas import tpu as pltpu


_VMEM_BUDGET_BYTES = 8 * 1024 * 1024  # for 2x(in block) + 2x(out block)


def _choose_time_tile(Tout: int, in_bytes_per_row: int, out_bytes_per_row: int) -> int:
    """Output rows per block: full extent when small, else a multiple of 8 that
    keeps the double-buffered in+out blocks inside the VMEM budget."""
    if Tout <= 8:
        return Tout
    per_row = 2 * (in_bytes_per_row + out_bytes_per_row)  # double-buffered
    cap = max(8, (_VMEM_BUDGET_BYTES // per_row) // 8 * 8)
    return int(min(cap, (Tout // 8) * 8))


def _concat_kernel(x_ref, o_ref, *, tt, factor, D):
    # x_ref block: (1, tt*factor, D); o_ref block: (1, tt, factor*D).
    # Interleave+concat of the factor splits is exactly a contiguous
    # row-major reshape (Tout*factor, D) -> (Tout, factor*D).
    o_ref[0] = x_ref[0].reshape(tt, factor * D)


def _select_copy_kernel(x_ref, o_ref):
    # Pure copy: the BlockSpec lane-window already selected x[:, ::factor],
    # so only the needed rows were DMA'd from HBM.
    o_ref[0] = x_ref[0]


def _subsample_fallback_kernel(x_ref, o_ref, *, T, D, factor, Tout):
    # concat=False general case (ragged T or non-lane-dense D): read whole rows
    # and keep every factor-th one in VMEM.
    # TODO(synk): a sublane-strided DMA (pl.ds(..., stride=factor) on an ANY-space
    # input ref) would cut the read traffic by ~factor here as well.
    x = x_ref[0]  # (T, D)
    n_full = T // factor
    if n_full > 0:
        bulk = x[: n_full * factor].reshape(n_full, factor, D)[:, 0, :]
        o_ref[0, :n_full, :] = bulk
    if Tout > n_full:  # static: one ragged tail row
        s = n_full * factor
        o_ref[0, n_full:n_full + 1, :] = x[s:s + 1, :]


def subsampling_layer(x, factor: int = 1, concat: bool = False):
    """Pallas implementation of SubsamplingLayer.forward."""
    B, T, D = x.shape
    if factor <= 1:
        return x  # identity for factor == 1 (concat of a single split is x itself)

    Tout = -(-T // factor)          # ceil(T / factor) == maxlen of the splits
    T_pad = Tout * factor
    itemsize = x.dtype.itemsize

    if concat:
        out_D = factor * D
        # Zero-pad the ragged tail once in XLA (<= factor-1 rows), instead of
        # materializing a second padded buffer inside the kernel.
        if T_pad != T:
            x = jnp.pad(x, ((0, 0), (0, T_pad - T), (0, 0)))
        tt = _choose_time_tile(Tout, factor * D * itemsize, out_D * itemsize)
        nt = pl.cdiv(Tout, tt)
        kernel = functools.partial(_concat_kernel, tt=tt, factor=factor, D=D)
        bytes_accessed = (B * T_pad * D + B * Tout * out_D) * itemsize
        return pl.pallas_call(
            kernel,
            out_shape=jax.ShapeDtypeStruct((B, Tout, out_D), x.dtype),
            grid=(B, nt),
            in_specs=[pl.BlockSpec((1, tt * factor, D), lambda b, t: (b, t, 0))],
            out_specs=pl.BlockSpec((1, tt, out_D), lambda b, t: (b, t, 0)),
            compiler_params=pltpu.CompilerParams(
                dimension_semantics=("parallel", "parallel")),
            cost_estimate=pl.CostEstimate(
                flops=0, transcendentals=0, bytes_accessed=bytes_accessed),
        )(x)

    # ---- concat=False: out = x[:, ::factor] ----
    if T % factor == 0 and D % 128 == 0:
        # Lane-dense strided read: view x (free reshape) as (B, Tout, factor*D)
        # and DMA only the first D lanes of every row -> reads exactly the kept
        # rows (~2*Tout*D bytes of HBM traffic instead of (T + Tout)*D).
        x_view = x.reshape(B, Tout, factor * D)
        tt = _choose_time_tile(Tout, D * itemsize, D * itemsize)
        nt = pl.cdiv(Tout, tt)
        bytes_accessed = 2 * B * Tout * D * itemsize
        return pl.pallas_call(
            _select_copy_kernel,
            out_shape=jax.ShapeDtypeStruct((B, Tout, D), x.dtype),
            grid=(B, nt),
            in_specs=[pl.BlockSpec((1, tt, D), lambda b, t: (b, t, 0))],
            out_specs=pl.BlockSpec((1, tt, D), lambda b, t: (b, t, 0)),
            compiler_params=pltpu.CompilerParams(
                dimension_semantics=("parallel", "parallel")),
            cost_estimate=pl.CostEstimate(
                flops=0, transcendentals=0, bytes_accessed=bytes_accessed),
        )(x_view)

    # Fallback (ragged T or D not a multiple of 128): whole-(T, D) blocks per
    # batch element, row selection in VMEM.
    kernel = functools.partial(
        _subsample_fallback_kernel, T=T, D=D, factor=factor, Tout=Tout)
    bytes_accessed = (B * T * D + B * Tout * D) * itemsize
    return pl.pallas_call(
        kernel,
        out_shape=jax.ShapeDtypeStruct((B, Tout, D), x.dtype),
        grid=(B,),
        in_specs=[pl.BlockSpec((1, T, D), lambda b: (b, 0, 0))],
        out_specs=pl.BlockSpec((1, Tout, D), lambda b: (b, 0, 0)),
        compiler_params=pltpu.CompilerParams(dimension_semantics=("parallel",)),
        cost_estimate=pl.CostEstimate(
            flops=0, transcendentals=0, bytes_accessed=bytes_accessed),
    )(x)


def _reference(x, factor, concat):
    """Pure-JAX reference mirroring the PyTorch forward exactly."""
    if concat:
        parts = [x[:, i::factor] for i in range(factor)]
        maxlen = max(p.shape[1] for p in parts)
        parts = [jnp.pad(p, ((0, 0), (0, maxlen - p.shape[1]), (0, 0))) for p in parts]
        return jnp.concatenate(parts, axis=-1)
    return x[:, ::factor]


if __name__ == "__main__":
    # Lane-dense feature dim (multiple of 128) per the perf review.
    B, T, D = 2, 16, 128
    key = jax.random.PRNGKey(0)
    x = jax.random.normal(key, (B, T, D), dtype=jnp.float32)

    # factor=3: ragged (exercises zero-padding / fallback path)
    # factor=4: divides T exactly (exercises the no-pad reshape kernel and the
    #           lane-window strided-read kernel)
    for factor in (3, 4):
        for concat in (True, False):
            out = subsampling_layer(x, factor=factor, concat=concat)
            out = jax.block_until_ready(out)
            ref = _reference(x, factor, concat)
            assert out.shape == ref.shape, (factor, concat, out.shape, ref.shape)
            assert jnp.allclose(out, ref), (factor, concat)

    print("KERNEL_OK")
</pallas_src>

<mosaic_0001>
module attributes {stable_mosaic.version = 11 : i64} {
  func.func @_concat_kernel(%arg0: i32, %arg1: i32, %arg2: memref<1x18x128xf32, #tpu.memory_space<vmem>>, %arg3: memref<1x6x384xf32, #tpu.memory_space<vmem>>) attributes {dimension_semantics = [#tpu.dimension_semantics<parallel>, #tpu.dimension_semantics<parallel>], iteration_bounds = array<i64: 2, 1>, scalar_prefetch = 0 : i64, scratch_operands = 0 : i64, tpu.core_type = #tpu.core_type<tc>, window_params = [{transform_indices = @transform_0, window_bounds = array<i64: 1, 18, 128>}, {transform_indices = @transform_1, window_bounds = array<i64: 1, 6, 384>}]} {
    %c0 = arith.constant 0 : index
    %c0_0 = arith.constant 0 : index
    %c0_1 = arith.constant 0 : index
    %0 = vector.load %arg2[%c0, %c0_0, %c0_1] : memref<1x18x128xf32, #tpu.memory_space<vmem>>, vector<1x18x128xf32>
    %1 = vector.shape_cast %0 : vector<1x18x128xf32> to vector<18x128xf32>
    %2 = vector.shape_cast %1 : vector<18x128xf32> to vector<6x384xf32>
    %c0_2 = arith.constant 0 : index
    %c0_3 = arith.constant 0 : index
    %c0_4 = arith.constant 0 : index
    %3 = vector.load %arg3[%c0_2, %c0_3, %c0_4] : memref<1x6x384xf32, #tpu.memory_space<vmem>>, vector<1x6x384xf32>
    %4 = vector.shape_cast %3 : vector<1x6x384xf32> to vector<6x384xf32>
    %5 = vector.shape_cast %2 : vector<6x384xf32> to vector<1x6x384xf32>
    tpu.vector_store %arg3[%c0_2, %c0_3, %c0_4], %5 {strides = array<i32>} : memref<1x6x384xf32, #tpu.memory_space<vmem>>, vector<1x6x384xf32>,
    return
  }
  func.func @transform_0(%arg0: i32, %arg1: i32) -> (i32, i32, i32) {
    %c0_i32 = arith.constant 0 : i32
    %c0_i32_0 = arith.constant 0 : i32
    return %arg0, %arg1, %c0_i32 : i32, i32, i32
  }
  func.func @transform_1(%arg0: i32, %arg1: i32) -> (i32, i32, i32) {
    %c0_i32 = arith.constant 0 : i32
    %c0_i32_0 = arith.constant 0 : i32
    return %arg0, %arg1, %c0_i32 : i32, i32, i32
  }
}

</mosaic_0001>

<llo_original>
// kernel: tpu_custom_call.1
$region0: #{tpu_custom_call.1}
  #allocation0 [shape = 'u32[]', space=smem, size = 0x4, offset = 0x4, fixed_abs, tag = 'smem constant byte address 0x4 - core index']
  #allocation1 [shape = 'u32[144,128]{1,0:T(1,128)}', space=vmem, size = 0x12000, scoped, tag = 'internal scratch']
  %s0 = inlined_call_operand.vmem [shape: f32[2,18,128], index: 0, kind: input, shape index: {}]
  %s1 = inlined_call_operand.vmem [shape: f32[2,6,384], index: 1, kind: output, shape index: {}]
  %s2 = sld [smem:[#allocation0]]
  $region37: #{tpu_custom_call.1} parent=0
    _
  %s4 = ssub.s32 1, %s2
  %s5 = scalar_select 0, %s4, %s2
  loop: start=0, step=1, limit=4
  $region2: #{tpu_custom_call.1} parent=0 // loop_pre_header
    _
  $region3: #{tpu_custom_call.1} parent=0 // loop_header
    %s7 = sphi 0, %s11
    %p8 = scmp.ge.s32.totalorder %s7, 4
    %s14 = sphi 0, %s26
    %s15 = sphi 0, %s22
    %s16 = sphi 0, %s14
    %s17 = sphi 0, %s15
    %s18 = sphi 0, %s16
    %s19 = sphi 0, %s17
    %s31 = sphi 0, %s33
    %s34 = sphi 0, %s31
    %s35 = sphi 0, %s34
    %s51 = sphi 0, %s35
    %s59 = sphi 0, %s61
    %s62 = sphi 0, %s59
    %s63 = sphi 0, %s62
    %s79 = sphi 0, %s63
  $region4: #{tpu_custom_call.1} parent=0 // loop_header_branch
    %10 = sbr.rel (%p8) target = $region8
  $region5: #{tpu_custom_call.1} parent=0 // loop_body
    %s12 = ssub.s32 %s7, 1
    %s13 = ssub.s32 %s7, 2
    %s20 = sadd.s32 1, %s15
    %p21 = scmp.ge.s32.totalorder %s20, 1
    %s22 = scalar_select %p21, 0, %s20
    %s23 = sadd.s32 1, %s14
    %s24 = scalar_select %p21, %s23, %s14
    %p25 = scmp.ge.s32.totalorder %s24, 2
    %s26 = scalar_select %p25, 0, %s24
    %s27 = ssub.s32 %s14, %s26
    %s28 = ssub.s32 %s15, %s22
    %s29 = sor.u32 %s27, %s28
    %p30 = scmp.eq.s32.totalorder %s29, 0
    %s32 = sadd.s32 %s31, 1
    %s33 = scalar_select %p30, %s31, %s32
    %p36 = pneg %p30
    %p37 = scmp.eq.s32.totalorder %s7, 1
    %p38 = por %p36, %p37
    %p39 = scmp.ne.s32.totalorder %s31, %s34
    %p40 = scmp.eq.s32.totalorder %s7, 0
    %p41 = por %p39, %p40
    %p42 = scmp.ne.s32.totalorder %s31, %s34
    %p43 = scmp.eq.s32.totalorder %s12, 1
    %p44 = por %p42, %p43
    %p45 = scmp.ne.s32.totalorder %s34, %s35
    %p46 = scmp.eq.s32.totalorder %s12, 0
    %p47 = por %p45, %p46
    %p48 = scmp.ne.s32.totalorder %s34, %s35
    %p49 = scmp.eq.s32.totalorder %s13, 1
    %p50 = por %p48, %p49
    %p52 = scmp.ne.s32.totalorder %s35, %s51
    %p53 = scmp.eq.s32.totalorder %s13, 0
    %p54 = por %p52, %p53
    %s55 = ssub.s32 %s14, %s26
    %s56 = ssub.s32 %s15, %s22
    %s57 = sor.u32 %s55, %s56
    %p58 = scmp.eq.s32.totalorder %s57, 0
    %s60 = sadd.s32 %s59, 1
    %s61 = scalar_select %p58, %s59, %s60
    %p64 = pneg %p58
    %p65 = scmp.eq.s32.totalorder %s7, 1
    %p66 = por %p64, %p65
    %p67 = scmp.ne.s32.totalorder %s59, %s62
    %p68 = scmp.eq.s32.totalorder %s7, 0
    %p69 = por %p67, %p68
    %p70 = scmp.ne.s32.totalorder %s59, %s62
    %p71 = scmp.eq.s32.totalorder %s12, 1
    %p72 = por %p70, %p71
    %p73 = scmp.ne.s32.totalorder %s62, %s63
    %p74 = scmp.eq.s32.totalorder %s12, 0
    %p75 = por %p73, %p74
    %p76 = scmp.ne.s32.totalorder %s62, %s63
    %p77 = scmp.eq.s32.totalorder %s13, 1
    %p78 = por %p76, %p77
    %p80 = scmp.ne.s32.totalorder %s63, %s79
    %p81 = scmp.eq.s32.totalorder %s13, 0
    %p82 = por %p80, %p81
    %p83 = scmp.le.s32.totalorder 1, %s7
    %p84 = scmp.lt.s32.totalorder %s7, 3
    %p85 = pnand %p83, %p84
    %p86 = pneg %p85
    // Predicated region
    $region9: #{tpu_custom_call.1} parent=5 // pred_check
      _
    $region10: #{tpu_custom_call.1} parent=5 // pred_check_branch
      %88 = sbr.rel (%p85) target = $region12
    $region11: #{tpu_custom_call.1} parent=5 // pred_region
      %s89 = ssub.s32 %s7, 1
    $region12: #{tpu_custom_call.1} parent=5 // pred_fallthru
      _
    %p90 = scmp.lt.s32.totalorder %s7, 2
    // Predicated region
    $region13: #{tpu_custom_call.1} parent=5 // pred_check
      %p91 = pneg %p90
    $region14: #{tpu_custom_call.1} parent=5 // pred_check_branch
      %93 = sbr.rel (%p91) target = $region16
    $region15: #{tpu_custom_call.1} parent=5 // pred_region
      // Predicated region
      $region17: #{tpu_custom_call.1} parent=15 // pred_check
        %p94 = pneg %p41
      $region18: #{tpu_custom_call.1} parent=15 // pred_check_branch
        %96 = sbr.rel (%p94) target = $region20
      $region19: #{tpu_custom_call.1} parent=15 // pred_region
        %s97 = smul.u32 3, %s15
        %p98 = scmp.lt.s32.totalorder %s14, 1
        %s99 = scalar_select %p98, %s14, 1
        %p100 = scmp.lt.s32.totalorder %s97, 2
        %s101 = scalar_select %p100, %s97, 2
        %s102 = smul.addr %s99, 3
        %s103 = sadd.s32 %s101, %s102
        %s104 = smul.addr %s103, 8
        %s105 = scalar_lea.vmem %s0, %s104
        %s106 = smul.u32 3, %s15
      $region20: #{tpu_custom_call.1} parent=15 // pred_fallthru
        _
    $region16: #{tpu_custom_call.1} parent=5 // pred_fallthru
      _
    %p107 = scmp.le.s32.totalorder 1, %s7
    %p108 = scmp.lt.s32.totalorder %s7, 3
    %p109 = pnand %p107, %p108
    %p110 = pneg %p109
    // Predicated region
    $region21: #{tpu_custom_call.1} parent=5 // pred_check
      _
    $region22: #{tpu_custom_call.1} parent=5 // pred_check_branch
      %112 = sbr.rel (%p109) target = $region24
    $region23: #{tpu_custom_call.1} parent=5 // pred_region
      %s113 = ssub.s32 %s7, 1
      %s114 = smul.u32 3, %s17
      %p115 = scmp.lt.s32.totalorder %s16, 1
      %s116 = scalar_select %p115, %s16, 1
      %p117 = scmp.lt.s32.totalorder %s114, 2
      %s118 = scalar_select %p117, %s114, 2
      %s119 = smul.addr %s116, 3
      %s120 = sadd.s32 %s118, %s119
      %s121 = smul.addr %s120, 8
      %s122 = scalar_lea.vmem %s0, %s121
      %p123 = pneg %p47
      %p124 = pneg %p44
      %p125 = pneg %p75
      %p126 = pneg %p72
      %p127 = scmp.lt.s32.totalorder %s16, 1
      %s128 = scalar_select %p127, %s16, 1
      %p129 = scmp.lt.s32.totalorder %s17, 0
      %s130 = scalar_select %p129, %s17, 0
      %s131 = smul.addr %s130, 3
      %s132 = smul.addr %s128, 3
      %s133 = sadd.s32 %s131, %s132
      %s134 = smul.addr %s133, 8
      %s135 = scalar_lea.vmem %s1, %s134
      %s136 = smul.u32 3, %s17
      %p137 = scmp.lt.s32.totalorder %s16, 1
      %s138 = scalar_select %p137, %s16, 1
      %p139 = scmp.lt.s32.totalorder %s136, 2
      %s140 = scalar_select %p139, %s136, 2
      %s141 = smul.addr %s138, 3
      %s142 = sadd.s32 %s140, %s141
      %s143 = smul.addr %s142, 8
      %s144 = scalar_lea.vmem %s0, %s143
      %s145 = smul.u32 3, %s17
      %p146 = scmp.lt.s32.totalorder %s16, 1
      %s147 = scalar_select %p146, %s16, 1
      %p148 = scmp.lt.s32.totalorder %s17, 0
      %s149 = scalar_select %p148, %s17, 0
      %s150 = smul.addr %s149, 3
      %s151 = smul.addr %s147, 3
      %s152 = sadd.s32 %s150, %s151
      %s153 = smul.addr %s152, 8
      %s154 = scalar_lea.vmem %s1, %s153
      %v155 = vld [vmem:[%s144] sm:$0xff]
      %v156 = vld [vmem:[%s144 + $0x8] sm:$0xff]
      %v157 = vld [vmem:[%s144 + $0x10] sm:$0x3]
      %vm158 = vcmask 1040384
      %v159 = vsel %vm158, %v155, 0.0
      %v160 = vrot.slane %v155, 2
      %vm161 = vcmask 1041409
      %v162 = vsel %vm161, %v160, %v159
      %v163 = vrot.slane %v155, 4
      %vm164 = vcmask 1042434
      %v165 = vsel %vm164, %v163, %v162
      %v166 = vrot.slane %v156, 6
      %vm167 = vcmask 1043459
      %v168 = vsel %vm167, %v166, %v165
      %vm169 = vcmask 1044484
      %v170 = vsel %vm169, %v156, %v168
      %v171 = vrot.slane %v156, 2
      %vm172 = vcmask 1045509
      %v173 = vsel %vm172, %v171, %v170
      %v174 = vrot.slane %v155, 1
      %v175 = vsel %vm158, %v174, 0.0
      %v176 = vrot.slane %v155, 3
      %v177 = vsel %vm161, %v176, %v175
      %v178 = vrot.slane %v155, 5
      %v179 = vsel %vm164, %v178, %v177
      %v180 = vrot.slane %v156, 7
      %v181 = vsel %vm167, %v180, %v179
      %v182 = vrot.slane %v156, 1
      %v183 = vsel %vm169, %v182, %v181
      %v184 = vrot.slane %v157, 3
      %v185 = vsel %vm172, %v184, %v183
      %v186 = vsel %vm158, %v160, 0.0
      %v187 = vsel %vm161, %v163, %v186
      %v188 = vsel %vm164, %v166, %v187
      %v189 = vsel %vm167, %v156, %v188
      %v190 = vsel %vm169, %v171, %v189
      %v191 = vrot.slane %v157, 4
      %v192 = vsel %vm172, %v191, %v190
      %193 = vst [vmem:[%s154] sm:$0x3f] %v173
      %194 = vst [vmem:[%s154 + $0x8] sm:$0x3f] %v185
      %195 = vst [vmem:[%s154 + $0x10] sm:$0x3f] %v192
      %p196 = scmp.lt.s32.totalorder %s16, 1
      %s197 = scalar_select %p196, %s16, 1
      %p198 = scmp.lt.s32.totalorder %s17, 0
      %s199 = scalar_select %p198, %s17, 0
      %s200 = smul.addr %s199, 3
      %s201 = smul.addr %s197, 3
      %s202 = sadd.s32 %s200, %s201
      %s203 = smul.addr %s202, 8
      %s204 = scalar_lea.vmem %s1, %s203
      // Predicated region
      $region25: #{tpu_custom_call.1} parent=23 // pred_check
        %p205 = pneg %p72
      $region26: #{tpu_custom_call.1} parent=23 // pred_check_branch
        %207 = sbr.rel (%p205) target = $region28
      $region27: #{tpu_custom_call.1} parent=23 // pred_region
        _
      $region28: #{tpu_custom_call.1} parent=23 // pred_fallthru
        _
    $region24: #{tpu_custom_call.1} parent=5 // pred_fallthru
      _
    %p208 = scmp.le.s32.totalorder 2, %s7
    // Predicated region
    $region29: #{tpu_custom_call.1} parent=5 // pred_check
      %p209 = pneg %p208
    $region30: #{tpu_custom_call.1} parent=5 // pred_check_branch
      %211 = sbr.rel (%p209) target = $region32
    $region31: #{tpu_custom_call.1} parent=5 // pred_region
      %s212 = ssub.s32 %s7, 2
      // Predicated region
      $region33: #{tpu_custom_call.1} parent=31 // pred_check
        %p213 = pneg %p78
      $region34: #{tpu_custom_call.1} parent=31 // pred_check_branch
        %215 = sbr.rel (%p213) target = $region36
      $region35: #{tpu_custom_call.1} parent=31 // pred_region
        %p216 = scmp.lt.s32.totalorder %s18, 1
        %s217 = scalar_select %p216, %s18, 1
        %p218 = scmp.lt.s32.totalorder %s19, 0
        %s219 = scalar_select %p218, %s19, 0
        %s220 = smul.addr %s219, 3
        %s221 = smul.addr %s217, 3
        %s222 = sadd.s32 %s220, %s221
        %s223 = smul.addr %s222, 8
        %s224 = scalar_lea.vmem %s1, %s223
      $region36: #{tpu_custom_call.1} parent=31 // pred_fallthru
        _
    $region32: #{tpu_custom_call.1} parent=5 // pred_fallthru
      _
  $region6: #{tpu_custom_call.1} parent=0 // loop_footer
    %s11 = sadd.s32 1, %s7
  $region7: #{tpu_custom_call.1} parent=0 // loop_footer_branch
    %6 = sbr.rel target = $region3
  $region8: #{tpu_custom_call.1} parent=0 // loop_exit
    _

</llo_original>
